<compile_context>
chip_gen: v7x
topology: tpu7x:2x2x1
jax: 0.10.0
libtpu: 0.0.40
codegen_flags: <defaults>
</compile_context>

<pallas_src>
import math

import jax
import jax.numpy as jnp
from jax.experimental import pallas as pl
from jax.experimental.pallas import tpu as pltpu

NEG_SLOPE = 0.01  # nn.LeakyReLU default


def _round_up(a, b):
    return (a + b - 1) // b * b


# ---------------------------------------------------------------------------
# Kernel 1: plain Activation('lrelu') forward — tiled elementwise LeakyReLU.
# ---------------------------------------------------------------------------
def leaky_relu_kernel(x_ref, o_ref):
    x = x_ref[...]
    o_ref[...] = jnp.maximum(x, NEG_SLOPE * x).astype(o_ref.dtype)


def activation_lrelu(x, *, max_tile_rows=512, max_tile_cols=1024, in_place=False):
    """Elementwise LeakyReLU over an arbitrarily shaped tensor.

    HBM-bandwidth-bound, so the wrapper does zero extra HBM passes:
      * leading dims are collapsed into rows (keeps the last dim -> free reshape
        on TPU's (8,128)-tiled layouts),
      * the grid uses pl.cdiv; ragged trailing blocks are fine because the
        out-of-bounds part of the output block is never written back,
      * no jnp.pad and no post-call slice.
    512x1024 f32 tiles keep the double-buffered footprint at ~8 MiB, well under
    v5e's 16 MiB default scoped-VMEM limit while staying near the HBM roofline.
    Set in_place=True (when the caller no longer needs x) to alias the output
    onto the input buffer via input_output_aliases.
    """
    shape, dtype = x.shape, x.dtype
    if x.ndim == 0:
        flat = x.reshape(1, 1)
    elif x.ndim == 1:
        flat = x.reshape(1, shape[0])
    else:
        flat = x.reshape(-1, shape[-1])  # collapse leading dims only (free)
    rows, cols = flat.shape

    # Block-shape constraints: second-to-last dim multiple of 8 (512 is) or the
    # full extent; last dim multiple of 128 (1024 is) or the full extent.
    tile_r = rows if rows <= max_tile_rows else max_tile_rows
    tile_c = cols if cols <= max_tile_cols else max_tile_cols

    itemsize = jnp.dtype(dtype).itemsize
    cost = pl.CostEstimate(
        flops=2 * rows * cols,
        transcendentals=0,
        bytes_accessed=2 * rows * cols * itemsize,
    )

    out = pl.pallas_call(
        leaky_relu_kernel,
        out_shape=jax.ShapeDtypeStruct((rows, cols), dtype),
        grid_spec=pltpu.PrefetchScalarGridSpec(
            num_scalar_prefetch=0,
            grid=(pl.cdiv(rows, tile_r), pl.cdiv(cols, tile_c)),
            in_specs=[pl.BlockSpec((tile_r, tile_c), lambda i, j: (i, j))],
            out_specs=pl.BlockSpec((tile_r, tile_c), lambda i, j: (i, j)),
        ),
        compiler_params=pltpu.CompilerParams(
            dimension_semantics=("parallel", "parallel"),
        ),
        cost_estimate=cost,
        input_output_aliases=({0: 0} if in_place else {}),
    )(flat)
    return out.reshape(shape)


# ---------------------------------------------------------------------------
# Kernel 2: fused Linear + bias + LeakyReLU (FCBlock usage of Activation).
# ---------------------------------------------------------------------------
def prepare_fc_params(weight, bias):
    """One-time, parameter-LOAD-time prep (NOT per forward call).

    weight: (Fout, Fin) PyTorch layout; bias: (Fout,).
    Returns (weight_t, bias2d, fout) with:
      weight_t: (Fin, round_up(Fout,128)) bf16  — transposed, cast, N-zero-padded
      bias2d  : (1,   round_up(Fout,128)) f32
    Hoisting the cast/pad here removes a full HBM read+write of the weights
    from every forward call.
    """
    fout, fin = weight.shape
    n_p = _round_up(fout, 128)
    w_t = jnp.asarray(weight).T.astype(jnp.bfloat16)          # (Fin, Fout)
    b2 = jnp.asarray(bias).reshape(1, fout).astype(jnp.float32)
    if n_p != fout:
        w_t = jnp.pad(w_t, ((0, 0), (0, n_p - fout)))
        b2 = jnp.pad(b2, ((0, 0), (0, n_p - fout)))
    return w_t, b2, fout


def _fc_kernel_single_k(x_ref, w_ref, b_ref, o_ref):
    # Whole K in one block: no accumulator scratch, no predicated init/finalize.
    x = x_ref[...].astype(jnp.bfloat16)          # in-kernel cast (VPU, cheap)
    y = jnp.dot(x, w_ref[...], preferred_element_type=jnp.float32) + b_ref[...]
    o_ref[...] = jnp.maximum(y, NEG_SLOPE * y).astype(o_ref.dtype)


def _fc_kernel_multi_k(x_ref, w_ref, b_ref, o_ref, acc_ref):
    k = pl.program_id(2)

    @pl.when(k == 0)
    def _():
        acc_ref[...] = jnp.zeros_like(acc_ref)

    acc_ref[...] += jnp.dot(
        x_ref[...].astype(jnp.bfloat16), w_ref[...],
        preferred_element_type=jnp.float32,
    )

    @pl.when(k == pl.num_programs(2) - 1)
    def _():
        y = acc_ref[...] + b_ref[...]
        o_ref[...] = jnp.maximum(y, NEG_SLOPE * y).astype(o_ref.dtype)


def fc_block(x, weight_t, bias2d, fout, *, tile_m=None, tile_n=None):
    """Fused y = LeakyReLU(x @ W^T + b).

    x: (..., Fin); weight_t/bias2d: outputs of prepare_fc_params (pre-cast,
    pre-transposed, N-padded to a multiple of 128).  No per-call padding of x:
      * K is tiled EXACTLY (divisor of Fin) or kept as one full block — never a
        ragged K block (garbage K columns would corrupt real outputs),
      * the M grid is ragged (pl.cdiv); garbage rows of the last block stay in
        their own output rows, which Pallas never writes back,
      * the output is allocated at (M, Fout) directly, so ragged N blocks'
        extra columns are simply dropped — no post-call slice.
    """
    fin, n_p = weight_t.shape
    lead = x.shape[:-1]
    m = math.prod(lead) if lead else 1
    out_dtype = x.dtype

    x2 = x.reshape(m, fin)  # collapse leading dims only (free on TPU)

    # ---- K tiling (exact; no ragged K blocks) -------------------------------
    if fin % 128 == 0:
        tile_k = next(t for t in (1024, 512, 256, 128) if fin % t == 0)
    else:
        # Odd Fin: one full-K block (block dim == full extent satisfies the
        # (8,128) rule).  Fine for the small / medium Fin this path targets.
        tile_k = fin
    k_steps = fin // tile_k

    # ---- M tiling ------------------------------------------------------------
    if tile_m is None:
        if m > 512:
            tile_m = 512                                 # multiple of 8
        elif m > 256:
            # Keep >=2 parallel M blocks so both v7x TensorCores get work.
            tile_m = _round_up(pl.cdiv(m, 2), 8)
        else:
            tile_m = m                                   # full extent
    # ---- N tiling (must be a multiple of 128; weights are N-padded) ----------
    if tile_n is None:
        tile_n = min(512, n_p)

    grid_m = pl.cdiv(m, tile_m)
    grid_n = pl.cdiv(fout, tile_n)

    # Only pre-cast x to bf16 when it will be re-read for many N tiles;
    # otherwise feed the native dtype and cast inside the kernel (saves a full
    # HBM pass over the activations).
    if grid_n > 2 and x2.dtype != jnp.bfloat16:
        x2 = x2.astype(jnp.bfloat16)

    x_item = jnp.dtype(x2.dtype).itemsize
    cost = pl.CostEstimate(
        flops=2 * m * fin * grid_n * tile_n,
        transcendentals=0,
        bytes_accessed=(
            m * fin * x_item * grid_n                                # x re-read per N tile
            + fin * n_p * jnp.dtype(weight_t.dtype).itemsize * grid_m  # w re-read per M tile
            + n_p * 4 * grid_m
            + m * fout * jnp.dtype(out_dtype).itemsize
        ),
    )

    # VMEM @ (512, 512, 1024) bf16 tiles + f32 acc ~= 7 MiB double-buffered —
    # comfortably under the 32 MiB scoped limit on v5e/v6e and v7x (64 MiB phys).
    params = pltpu.CompilerParams(
        dimension_semantics=(("parallel", "parallel")
                             if k_steps == 1
                             else ("parallel", "parallel", "arbitrary")),
        vmem_limit_bytes=32 * 1024 * 1024,
    )

    if k_steps == 1:
        out = pl.pallas_call(
            _fc_kernel_single_k,
            out_shape=jax.ShapeDtypeStruct((m, fout), out_dtype),
            grid_spec=pltpu.PrefetchScalarGridSpec(
                num_scalar_prefetch=0,
                grid=(grid_m, grid_n),
                in_specs=[
                    pl.BlockSpec((tile_m, tile_k), lambda i, j: (i, 0)),
                    pl.BlockSpec((tile_k, tile_n), lambda i, j: (0, j)),
                    pl.BlockSpec((1, tile_n), lambda i, j: (0, j)),
                ],
                out_specs=pl.BlockSpec((tile_m, tile_n), lambda i, j: (i, j)),
            ),
            compiler_params=params,
            cost_estimate=cost,
        )(x2, weight_t, bias2d)
    else:
        out = pl.pallas_call(
            _fc_kernel_multi_k,
            out_shape=jax.ShapeDtypeStruct((m, fout), out_dtype),
            grid_spec=pltpu.PrefetchScalarGridSpec(
                num_scalar_prefetch=0,
                grid=(grid_m, grid_n, k_steps),
                in_specs=[
                    pl.BlockSpec((tile_m, tile_k), lambda i, j, k: (i, k)),
                    pl.BlockSpec((tile_k, tile_n), lambda i, j, k: (k, j)),
                    pl.BlockSpec((1, tile_n), lambda i, j, k: (0, j)),
                ],
                out_specs=pl.BlockSpec((tile_m, tile_n), lambda i, j, k: (i, j)),
                scratch_shapes=[pltpu.VMEM((tile_m, tile_n), jnp.float32)],
            ),
            compiler_params=params,
            cost_estimate=cost,
        )(x2, weight_t, bias2d)

    return out.reshape(*lead, fout)


# ---------------------------------------------------------------------------
# References
# ---------------------------------------------------------------------------
def reference_lrelu(x):
    return jnp.maximum(x, NEG_SLOPE * x)


def reference_fc(x, weight, bias):
    # Mirror the kernel's bf16 MXU inputs with f32 accumulation.
    xq = x.astype(jnp.bfloat16).astype(jnp.float32)
    wq = weight.astype(jnp.bfloat16).astype(jnp.float32)
    y = jnp.einsum("...k,nk->...n", xq, wq,
                   precision=jax.lax.Precision.HIGHEST) + bias
    return jnp.maximum(y, NEG_SLOPE * y)


if __name__ == "__main__":
    key = jax.random.PRNGKey(0)
    kx, kw, kb, kx2, kw2, kb2, kx3 = jax.random.split(key, 7)

    # --- 1) bare Activation('lrelu') forward --------------------------------
    B, S, FIN, FOUT = 2, 8, 32, 64
    x = jax.random.normal(kx, (B, S, FIN), dtype=jnp.float32)

    act_out = jax.block_until_ready(activation_lrelu(x))
    assert act_out.shape == x.shape
    assert jnp.allclose(act_out, reference_lrelu(x), atol=1e-6, rtol=1e-6)

    # In-place-aliased variant (caller would normally no longer need x).
    act_ip = jax.block_until_ready(activation_lrelu(x, in_place=True))
    assert jnp.allclose(act_ip, reference_lrelu(x), atol=1e-6, rtol=1e-6)

    # Ragged-row / non-128-lane case (rows > tile, cols not a multiple of 128).
    x_big = jax.random.normal(kx3, (530, 160), dtype=jnp.float32)
    act_big = jax.block_until_ready(activation_lrelu(x_big))
    assert jnp.allclose(act_big, reference_lrelu(x_big), atol=1e-6, rtol=1e-6)

    # --- 2) fused Linear + bias + LeakyReLU (FCBlock usage), single-K path ---
    w1 = jax.random.uniform(kw, (FOUT, FIN), dtype=jnp.float32,
                            minval=-1.0, maxval=1.0) / jnp.sqrt(FIN)
    b1 = jax.random.uniform(kb, (FOUT,), dtype=jnp.float32,
                            minval=-0.1, maxval=0.1)
    w1_t, b1_p, fout1 = prepare_fc_params(w1, b1)   # one-time, load-time prep

    out1 = jax.block_until_ready(fc_block(x, w1_t, b1_p, fout1))
    ref1 = reference_fc(x, w1, b1)
    assert out1.shape == (B, S, FOUT)
    assert jnp.allclose(out1, ref1, atol=2e-3, rtol=2e-3), float(
        jnp.max(jnp.abs(out1 - ref1)))

    # --- 3) multi-K accumulator path + ragged-N output (Fout not mult of 128) -
    FIN2, FOUT2 = 384, 192
    x2 = jax.random.normal(kx2, (B, S, FIN2), dtype=jnp.float32)
    w2 = jax.random.uniform(kw2, (FOUT2, FIN2), dtype=jnp.float32,
                            minval=-1.0, maxval=1.0) / jnp.sqrt(FIN2)
    b2 = jax.random.uniform(kb2, (FOUT2,), dtype=jnp.float32,
                            minval=-0.1, maxval=0.1)
    w2_t, b2_p, fout2 = prepare_fc_params(w2, b2)

    out2 = jax.block_until_ready(fc_block(x2, w2_t, b2_p, fout2))
    ref2 = reference_fc(x2, w2, b2)
    assert out2.shape == (B, S, FOUT2)
    assert jnp.allclose(out2, ref2, atol=2e-3, rtol=2e-3), float(
        jnp.max(jnp.abs(out2 - ref2)))

    # TODO(synk): Maxout's host-side torch.mean(...).cpu().numpy() argmax branch
    # and train-time nn.Dropout RNG are not implemented (hp.activation='lrelu',
    # hp.use_dropout=False).
    print("KERNEL_OK")
</pallas_src>

<mosaic_0001>
module attributes {stable_mosaic.version = 11 : i64} {
  func.func @leaky_relu_kernel(%arg0: i32, %arg1: i32, %arg2: memref<16x32xf32, #tpu.memory_space<vmem>>, %arg3: memref<16x32xf32, #tpu.memory_space<vmem>>) attributes {dimension_semantics = [#tpu.dimension_semantics<parallel>, #tpu.dimension_semantics<parallel>], iteration_bounds = array<i64: 1, 1>, scalar_prefetch = 0 : i64, scratch_operands = 0 : i64, tpu.core_type = #tpu.core_type<tc>, window_params = [{transform_indices = @transform_0, window_bounds = array<i64: 16, 32>}, {transform_indices = @transform_1, window_bounds = array<i64: 16, 32>}]} {
    %c0 = arith.constant 0 : index
    %c0_0 = arith.constant 0 : index
    %0 = vector.load %arg2[%c0, %c0_0] : memref<16x32xf32, #tpu.memory_space<vmem>>, vector<16x32xf32>
    %cst = arith.constant 0.00999999977 : f32
    %1 = vector.broadcast %cst : f32 to vector<16x32xf32>
    %2 = arith.mulf %1, %0 : vector<16x32xf32>
    %3 = arith.maximumf %0, %2 : vector<16x32xf32>
    %c0_1 = arith.constant 0 : index
    %c0_2 = arith.constant 0 : index
    %4 = vector.load %arg3[%c0_1, %c0_2] : memref<16x32xf32, #tpu.memory_space<vmem>>, vector<16x32xf32>
    tpu.vector_store %arg3[%c0_1, %c0_2], %3 {strides = array<i32>} : memref<16x32xf32, #tpu.memory_space<vmem>>, vector<16x32xf32>,
    return
  }
  func.func @transform_0(%arg0: i32, %arg1: i32) -> (i32, i32) {
    %c0_i32 = arith.constant 0 : i32
    return %arg0, %arg1 : i32, i32
  }
  func.func @transform_1(%arg0: i32, %arg1: i32) -> (i32, i32) {
    %c0_i32 = arith.constant 0 : i32
    return %arg0, %arg1 : i32, i32
  }
}

</mosaic_0001>

<llo_original>
// kernel: tpu_custom_call.1
$region0: #{tpu_custom_call.1}
  #allocation0 [shape = 'u32[]', space=smem, size = 0x4, offset = 0x4, fixed_abs, tag = 'smem constant byte address 0x4 - core index']
  #allocation1 [shape = 'u32[144,128]{1,0:T(1,128)}', space=vmem, size = 0x12000, scoped, tag = 'internal scratch']
  %s0 = inlined_call_operand.hbm [shape: f32[16,32], index: 0, kind: input, shape index: {}]
  %s1 = inlined_call_operand.hbm [shape: f32[16,32], index: 1, kind: output, shape index: {}]
  %s2 = sld [smem:[#allocation0]]
  $region18: #{tpu_custom_call.1} parent=0
    _
  %s4 = ssub.s32 1, %s2
  %s5 = scalar_select 0, %s4, %s2
  $region1: #{tpu_custom_call.1} parent=0
    #allocation2 [shape = 'u8[8192]{0}', space=vmem, size = 0x2000, scoped, tag = 'input window, operand 0, single buffered']
    #allocation3 [shape = 's32[1]{0}', space=sflag, size = 0x4, scoped, tag = 'scoped memory for tpu_custom_call.1']
    #allocation4 [shape = 's32[1]{0}', space=sflag, size = 0x4, scoped, tag = 'scoped memory for tpu_custom_call.1']
    #allocation5 [shape = 'u8[8192]{0}', space=vmem, size = 0x2000, scoped, tag = 'output window, operand 0, single buffered']
    %6 = vsyncpa [#allocation3], 0
    %7 = vsyncpa [#allocation4], 0
    // Predicated region
    $region2: #{tpu_custom_call.1} parent=1 // pred_check
      _
    $region3: #{tpu_custom_call.1} parent=1 // pred_check_branch
      %9 = sbr.rel (0) target = $region5
    $region4: #{tpu_custom_call.1} parent=1 // pred_region
      %s11 = ssub.s32 256, 256
      %12 = vsyncadd [#allocation3], %s11
      %s13 = sshll.u32 [#allocation2], 4
      %s14 = int_to_ptr.vmem [resolvable:$true] %s13
      %19 = dma.hbm_to_vmem [thread:$0]  %s0, 256, %s14, [#allocation3], 128, 128, 8
    $region5: #{tpu_custom_call.1} parent=1 // pred_fallthru
      _
    // Predicated region
    $region6: #{tpu_custom_call.1} parent=1 // pred_check
      _
    $region7: #{tpu_custom_call.1} parent=1 // pred_check_branch
      %21 = sbr.rel (0) target = $region9
    $region8: #{tpu_custom_call.1} parent=1 // pred_region
      %22 = dma.done [#allocation3], 256
    $region9: #{tpu_custom_call.1} parent=1 // pred_fallthru
      _
    %v23 = vld [vmem:[#allocation2] sm:$0xff]
    %v24 = vld [vmem:[#allocation2 + $0x8] sm:$0xff]
    %v25 = vmul.f32 %v23, 0.01
    %v26 = vmul.f32 %v24, 0.01
    %v27 = vmax.f32 %v23, %v25
    %v28 = vmax.f32 %v24, %v26
    %vm29 = vcmask 261120
    %30 = vst.msk [vmem:[#allocation5] sm:$0xff] %vm29, %v27
    %31 = vst.msk [vmem:[#allocation5 + $0x8] sm:$0xff] %vm29, %v28
    // Predicated region
    $region10: #{tpu_custom_call.1} parent=1 // pred_check
      _
    $region11: #{tpu_custom_call.1} parent=1 // pred_check_branch
      %33 = sbr.rel (0) target = $region13
    $region12: #{tpu_custom_call.1} parent=1 // pred_region
      %s35 = ssub.s32 256, 256
      %36 = vsyncadd [#allocation4], %s35
      %s37 = sshll.u32 [#allocation5], 4
      %s38 = int_to_ptr.vmem [resolvable:$true] %s37
      %43 = dma.vmem_to_hbm [thread:$0]  %s38, 256, %s1, [#allocation4], 128, 128, 8
    $region13: #{tpu_custom_call.1} parent=1 // pred_fallthru
      _
    // Predicated region
    $region14: #{tpu_custom_call.1} parent=1 // pred_check
      _
    $region15: #{tpu_custom_call.1} parent=1 // pred_check_branch
      %45 = sbr.rel (0) target = $region17
    $region16: #{tpu_custom_call.1} parent=1 // pred_region
      %46 = dma.done [#allocation4], 256
    $region17: #{tpu_custom_call.1} parent=1 // pred_fallthru
      _
    %47 = vsyncpa [#allocation3], 1
    %48 = vsyncpa [#allocation4], 1

</llo_original>
